<compile_context>
chip_gen: v6e
topology: v6e:2x2x1
jax: 0.10.0
libtpu: 0.0.40
codegen_flags: <defaults>
</compile_context>

<pallas_src>
import jax
import jax.numpy as jnp
from jax.experimental import pallas as pl
from jax.experimental.pallas import tpu as pltpu


# ----------------------------------------------------------------------------
# Fused kernel factory
# ----------------------------------------------------------------------------
def _make_kernel(*, H1, row_offs, sc_row0, use_sc_matmul):
    r0, r1, r2 = row_offs

    def kernel(*refs):
        if use_sc_matmul:
            x_ref, a1_ref, b1_ref, a2_ref, b2_ref, s_ref, o_ref, y1p = refs
        else:
            x_ref, a1_ref, b1_ref, a2_ref, b2_ref, o_ref, y1p = refs
            s_ref = None

        f32 = jnp.float32

        # Zero only the two border rows of the conv2-input scratch (interior is
        # fully overwritten below; done every step so megacore splitting of the
        # batch axis cannot leave a core with an uninitialized border).
        zrow = jnp.zeros((1, y1p.shape[1]), y1p.dtype)
        y1p[0:1, :] = zrow
        y1p[H1 + 1:H1 + 2, :] = zrow

        # ---- conv1 + bn1 + relu ------------------------------------------
        # 3 accumulating matmuls, one per kh row tap.  kw taps, column padding
        # and the conv1 stride live in the banded weight matrices a1_ref[kh].
        acc1 = jnp.dot(x_ref[0, r0:r0 + H1, :], a1_ref[0], preferred_element_type=f32)
        acc1 = acc1 + jnp.dot(x_ref[0, r1:r1 + H1, :], a1_ref[1], preferred_element_type=f32)
        acc1 = acc1 + jnp.dot(x_ref[0, r2:r2 + H1, :], a1_ref[2], preferred_element_type=f32)
        y1 = jnp.maximum(acc1 + b1_ref[...], 0.0)
        # The (W1+2)*Hid-wide result already carries zero column borders
        # (zero columns in a1 + zero border bias), so the full-width store
        # leaves the conv2 zero padding in place.
        y1p[1:H1 + 1, :] = y1.astype(y1p.dtype)

        # ---- conv2 + bn2 + shortcut + relu -------------------------------
        acc2 = jnp.dot(y1p[0:H1, :], a2_ref[0], preferred_element_type=f32)
        acc2 = acc2 + jnp.dot(y1p[1:H1 + 1, :], a2_ref[1], preferred_element_type=f32)
        acc2 = acc2 + jnp.dot(y1p[2:H1 + 2, :], a2_ref[2], preferred_element_type=f32)
        acc2 = acc2 + b2_ref[...]

        sc = x_ref[0, sc_row0:sc_row0 + H1, :]
        if use_sc_matmul:
            # option-'A' stride-2 shortcut: 0/1 selection matmul does the
            # spatial ::2 subsample + channel pad in one lane-dense MXU pass.
            acc2 = acc2 + jnp.dot(sc, s_ref[...], preferred_element_type=f32)
        else:
            acc2 = acc2 + sc.astype(f32)

        o_ref[0, :, :] = jnp.maximum(acc2, 0.0).astype(o_ref.dtype)

    return kernel


# ----------------------------------------------------------------------------
# BasicBlock forward (matches the PyTorch module's forward, eval-mode BN)
# ----------------------------------------------------------------------------
def fold_bn(gamma, beta, mean, var, eps=1e-5):
    scale = gamma / jnp.sqrt(var + eps)
    bias = beta - mean * scale
    return scale, bias


def basic_block_forward(x_nchw, params, *, stride=1, option='A'):
    w1, w2 = params['conv1_w'], params['conv2_w']      # HWIO (3,3,Cin,Hid),(3,3,Hid,Cout)
    Cin, Hid = w1.shape[2], w1.shape[3]
    Cout = w2.shape[3]
    assert w2.shape[2] == Hid

    N, C, H, W = x_nchw.shape
    assert C == Cin
    assert H % stride == 0 and W % stride == 0
    H1, W1 = H // stride, W // stride

    # Fold eval-mode BN: scale into the conv weights, bias added in-kernel.
    s1, b1 = fold_bn(*params['bn1'])
    s2, b2 = fold_bn(*params['bn2'])
    w1f = w1.astype(jnp.float32) * s1
    w2f = w2.astype(jnp.float32) * s2

    # Shortcut configuration (mirrors the module).
    if stride == 1 and Cin == Cout:
        ch_pad = 0
    elif stride == 2 and option == 'A':
        ch_pad = Cout // 4
        assert Cin + 2 * ch_pad == Cout, "option-'A' channel pad must match"
        assert H % 2 == 0 and W % 2 == 0
    else:
        # TODO(synk): option 'B' (1x1 conv + BN) shortcut not implemented.
        raise NotImplementedError("only identity and option-'A' shortcuts")

    K1 = W * Cin              # conv1 lhs lane width   (128 for the test configs)
    N1 = (W1 + 2) * Hid       # conv1 out / conv2 lhs lane width (zero col borders)
    N2 = W1 * Cout            # output lane width      (128 for the test configs)

    # ---- banded weight matrices (built once, glue-side) ----
    wo = jnp.arange(W1)
    kw = jnp.arange(3)
    wi = jnp.arange(W)
    # A1[kh][w_in*Cin+ci, (w_out+1)*Hid+f] = w1f[kh,kw,ci,f] where w_in = s*w_out+kw-1
    sel1 = (wi[:, None, None] ==
            stride * wo[None, :, None] + kw[None, None, :] - 1).astype(jnp.float32)
    A1 = jnp.einsum('xok,hkcf->hxcof', sel1, w1f).reshape(3, K1, W1 * Hid)
    A1 = jnp.pad(A1, ((0, 0), (0, 0), (Hid, Hid))).astype(jnp.bfloat16)   # (3,K1,N1)
    # A2[kh][g*Hid+c, w_out*Cout+co] = w2f[kh,kw,c,co] where g = w_out+kw
    g = jnp.arange(W1 + 2)
    sel2 = (g[:, None, None] == wo[None, :, None] + kw[None, None, :]).astype(jnp.float32)
    A2 = jnp.einsum('gok,hkcf->hgcof', sel2, w2f).reshape(3, N1, N2).astype(jnp.bfloat16)

    b1row = jnp.concatenate([jnp.zeros((Hid,), jnp.float32),
                             jnp.tile(b1.astype(jnp.float32), W1),
                             jnp.zeros((Hid,), jnp.float32)]).reshape(1, N1)
    b2row = jnp.tile(b2.astype(jnp.float32), W1).reshape(1, N2)

    # ---- input slab: NHWC rows packed on the lane dim, row-padded only ----
    x_nhwc = jnp.transpose(x_nchw, (0, 2, 3, 1)).astype(jnp.bfloat16)     # API boundary
    xs = jnp.pad(x_nhwc.reshape(N, H, K1), ((0, 0), (1, 1), (0, 0)))      # (N, H+2, K1)
    if stride == 1:
        x_in = xs
        row_offs = (0, 1, 2)
        sc_row0 = 1
    else:
        # even padded rows first, then odd padded rows -> every kh tap is a
        # contiguous row slice (kh=0 -> even, kh=1 -> odd, kh=2 -> even+1).
        half = (H + 2) // 2
        x_in = jnp.concatenate([xs[:, 0::2, :], xs[:, 1::2, :]], axis=1)  # (N, H+2, K1)
        row_offs = (0, half, 1)
        sc_row0 = half        # odd padded rows == original rows 0,2,4,...
    R = x_in.shape[1]

    operands = [x_in, A1, b1row, A2, b2row]
    in_specs = [
        pl.BlockSpec((1, R, K1), lambda n: (n, 0, 0)),
        pl.BlockSpec((3, K1, N1), lambda n: (0, 0, 0)),
        pl.BlockSpec((1, N1), lambda n: (0, 0)),
        pl.BlockSpec((3, N1, N2), lambda n: (0, 0, 0)),
        pl.BlockSpec((1, N2), lambda n: (0, 0)),
    ]
    sc_flops = 0
    if ch_pad:
        # 0/1 selection matrix: S[w_in*Cin+ci, w_out*Cout+(ci+pad)] = 1 iff w_in == 2*w_out
        selw = (wi[:, None] == 2 * wo[None, :]).astype(jnp.float32)               # (W, W1)
        selc = (jnp.arange(Cout)[None, :] ==
                jnp.arange(Cin)[:, None] + ch_pad).astype(jnp.float32)            # (Cin, Cout)
        S = jnp.einsum('wo,cd->wcod', selw, selc).reshape(K1, N2).astype(jnp.bfloat16)
        operands.append(S)
        in_specs.append(pl.BlockSpec((K1, N2), lambda n: (0, 0)))
        sc_flops = 2 * H1 * K1 * N2

    kernel = _make_kernel(H1=H1, row_offs=row_offs, sc_row0=sc_row0,
                          use_sc_matmul=bool(ch_pad))

    flops = N * (2 * 3 * H1 * K1 * N1 + 2 * 3 * H1 * N1 * N2 + sc_flops)
    bytes_accessed = (x_in.size * 2 + A1.size * 2 + A2.size * 2
                      + b1row.size * 4 + b2row.size * 4
                      + (operands[5].size * 2 if ch_pad else 0)
                      + N * H1 * N2 * 2)

    out = pl.pallas_call(
        kernel,
        out_shape=jax.ShapeDtypeStruct((N, H1, N2), jnp.bfloat16),
        grid=(N,),
        in_specs=in_specs,
        out_specs=pl.BlockSpec((1, H1, N2), lambda n: (n, 0, 0)),
        scratch_shapes=[pltpu.VMEM((H1 + 2, N1), jnp.bfloat16)],
        compiler_params=pltpu.CompilerParams(dimension_semantics=("parallel",)),
        cost_estimate=pl.CostEstimate(flops=flops, transcendentals=0,
                                      bytes_accessed=bytes_accessed),
    )(*operands)

    # API boundary only: back to NCHW f32 (lane-dense bf16 is the kernel format).
    out_nchw = jnp.transpose(out.reshape(N, H1, W1, Cout), (0, 3, 1, 2)).astype(jnp.float32)
    return out_nchw, [out_nchw]


# ----------------------------------------------------------------------------
# Deterministic parameter init (synthetic; shapes follow the module __init__)
# ----------------------------------------------------------------------------
def init_basic_block_params(key, in_planes, planes, hidden_planes=None):
    if hidden_planes is None:
        hidden_planes = planes
    ks = jax.random.split(key, 10)
    w1 = jax.random.normal(ks[0], (3, 3, in_planes, hidden_planes), jnp.float32) * 0.2
    w2 = jax.random.normal(ks[1], (3, 3, hidden_planes, planes), jnp.float32) * 0.2
    bn1 = (1.0 + 0.1 * jax.random.normal(ks[2], (hidden_planes,), jnp.float32),
           0.1 * jax.random.normal(ks[3], (hidden_planes,), jnp.float32),
           0.1 * jax.random.normal(ks[4], (hidden_planes,), jnp.float32),
           0.5 + jax.random.uniform(ks[5], (hidden_planes,), jnp.float32))
    bn2 = (1.0 + 0.1 * jax.random.normal(ks[6], (planes,), jnp.float32),
           0.1 * jax.random.normal(ks[7], (planes,), jnp.float32),
           0.1 * jax.random.normal(ks[8], (planes,), jnp.float32),
           0.5 + jax.random.uniform(ks[9], (planes,), jnp.float32))
    return {'conv1_w': w1, 'conv2_w': w2, 'bn1': bn1, 'bn2': bn2}


# ----------------------------------------------------------------------------
# Pure-JAX reference.  bf16=True mirrors the kernel's precision policy
# (bf16 operands, f32 accumulation); bf16=False is the full-f32 reference.
# ----------------------------------------------------------------------------
def ref_forward(x_nchw, params, *, stride=1, bf16=False):
    w1, w2 = params['conv1_w'], params['conv2_w']
    Cin, Cout = w1.shape[2], w2.shape[3]
    s1, b1 = fold_bn(*params['bn1'])
    s2, b2 = fold_bn(*params['bn2'])

    def conv(v, w, s, strd):
        w = w * s
        if bf16:
            v = v.astype(jnp.bfloat16)
            w = w.astype(jnp.bfloat16)
        return jax.lax.conv_general_dilated(
            v, w, window_strides=(strd, strd), padding=((1, 1), (1, 1)),
            dimension_numbers=('NHWC', 'HWIO', 'NHWC'),
            preferred_element_type=jnp.float32,
            precision=jax.lax.Precision.HIGHEST)

    x = jnp.transpose(x_nchw, (0, 2, 3, 1)).astype(jnp.float32)
    out = jax.nn.relu(conv(x, w1, s1, stride) + b1)
    out = conv(out, w2, s2, 1) + b2
    if stride != 1 or Cin != Cout:
        pad = Cout // 4
        sc = jnp.pad(x[:, ::2, ::2, :], ((0, 0), (0, 0), (0, 0), (pad, pad)))
    else:
        sc = x
    if bf16:
        sc = sc.astype(jnp.bfloat16).astype(jnp.float32)
    out = jax.nn.relu(out + sc)
    return jnp.transpose(out, (0, 3, 1, 2))


def _check(out, ref, atol, rtol, tag):
    ok = bool(jnp.allclose(out, ref, atol=atol, rtol=rtol))
    assert ok, f"{tag}: max abs diff = {float(jnp.max(jnp.abs(out - ref)))}"


if __name__ == "__main__":
    key = jax.random.PRNGKey(0)
    k_p1, k_p2, k_x1, k_x2 = jax.random.split(key, 4)

    # Config 1: identity shortcut (stride=1, in_planes == planes); W*Cin = 128 lanes.
    params1 = init_basic_block_params(k_p1, in_planes=8, planes=8)
    x1 = jax.random.normal(k_x1, (2, 8, 16, 16), jnp.float32)
    out1, _ = basic_block_forward(x1, params1, stride=1)
    out1 = jax.block_until_ready(out1)
    assert out1.shape == (2, 8, 16, 16)
    ref1_b = ref_forward(x1, params1, stride=1, bf16=True)
    ref1_b = ref1_b.astype(jnp.bfloat16).astype(jnp.float32)   # kernel output is bf16
    ref1_f = ref_forward(x1, params1, stride=1, bf16=False)
    _check(out1, ref1_b, 1e-2, 1e-2, "cfg1 vs bf16 ref")
    _check(out1, ref1_f, 6e-2, 6e-2, "cfg1 vs f32 ref")

    # Config 2: option-'A' shortcut (stride=2, in_planes 8 -> planes 16); W1*Cout = 128 lanes.
    params2 = init_basic_block_params(k_p2, in_planes=8, planes=16)
    x2 = jax.random.normal(k_x2, (2, 8, 16, 16), jnp.float32)
    out2, _ = basic_block_forward(x2, params2, stride=2)
    out2 = jax.block_until_ready(out2)
    assert out2.shape == (2, 16, 8, 8)
    ref2_b = ref_forward(x2, params2, stride=2, bf16=True)
    ref2_b = ref2_b.astype(jnp.bfloat16).astype(jnp.float32)
    ref2_f = ref_forward(x2, params2, stride=2, bf16=False)
    _check(out2, ref2_b, 1e-2, 1e-2, "cfg2 vs bf16 ref")
    _check(out2, ref2_f, 6e-2, 6e-2, "cfg2 vs f32 ref")

    print("KERNEL_OK")
</pallas_src>

<mosaic_0001>
module attributes {stable_mosaic.version = 11 : i64} {
  func.func @kernel(%arg0: i32, %arg1: memref<1x18x128xbf16, #tpu.memory_space<vmem>>, %arg2: memref<3x128x144xbf16, #tpu.memory_space<vmem>>, %arg3: memref<1x144xf32, #tpu.memory_space<vmem>>, %arg4: memref<3x144x128xbf16, #tpu.memory_space<vmem>>, %arg5: memref<1x128xf32, #tpu.memory_space<vmem>>, %arg6: memref<1x16x128xbf16, #tpu.memory_space<vmem>>, %arg7: memref<18x144xbf16, #tpu.memory_space<vmem>>) attributes {dimension_semantics = [#tpu.dimension_semantics<parallel>], iteration_bounds = array<i64: 2>, scalar_prefetch = 0 : i64, scratch_operands = 1 : i64, tpu.core_type = #tpu.core_type<tc>, window_params = [{transform_indices = @transform_0, window_bounds = array<i64: 1, 18, 128>}, {pipeline_mode = #tpu.pipeline_mode<synchronous>, transform_indices = @transform_1, window_bounds = array<i64: 3, 128, 144>}, {pipeline_mode = #tpu.pipeline_mode<synchronous>, transform_indices = @transform_2, window_bounds = array<i64: 1, 144>}, {pipeline_mode = #tpu.pipeline_mode<synchronous>, transform_indices = @transform_3, window_bounds = array<i64: 3, 144, 128>}, {pipeline_mode = #tpu.pipeline_mode<synchronous>, transform_indices = @transform_4, window_bounds = array<i64: 1, 128>}, {transform_indices = @transform_5, window_bounds = array<i64: 1, 16, 128>}]} {
    %cst = arith.constant 0.000000e+00 : bf16
    %0 = vector.broadcast %cst : bf16 to vector<1x144xbf16>
    %c0 = arith.constant 0 : index
    %c0_0 = arith.constant 0 : index
    %1 = vector.load %arg7[%c0, %c0_0] : memref<18x144xbf16, #tpu.memory_space<vmem>>, vector<1x144xbf16>
    tpu.vector_store %arg7[%c0, %c0_0], %0 {strides = array<i32>} : memref<18x144xbf16, #tpu.memory_space<vmem>>, vector<1x144xbf16>,
    %c17 = arith.constant 17 : index
    %c0_1 = arith.constant 0 : index
    %2 = vector.load %arg7[%c17, %c0_1] : memref<18x144xbf16, #tpu.memory_space<vmem>>, vector<1x144xbf16>
    tpu.vector_store %arg7[%c17, %c0_1], %0 {strides = array<i32>} : memref<18x144xbf16, #tpu.memory_space<vmem>>, vector<1x144xbf16>,
    %c0_2 = arith.constant 0 : index
    %c0_3 = arith.constant 0 : index
    %c0_4 = arith.constant 0 : index
    %3 = vector.load %arg1[%c0_2, %c0_3, %c0_4] : memref<1x18x128xbf16, #tpu.memory_space<vmem>>, vector<1x16x128xbf16>
    %4 = vector.shape_cast %3 : vector<1x16x128xbf16> to vector<16x128xbf16>
    %c0_5 = arith.constant 0 : index
    %c0_6 = arith.constant 0 : index
    %c0_7 = arith.constant 0 : index
    %5 = vector.load %arg2[%c0_5, %c0_6, %c0_7] : memref<3x128x144xbf16, #tpu.memory_space<vmem>>, vector<1x128x144xbf16>
    %6 = vector.shape_cast %5 : vector<1x128x144xbf16> to vector<128x144xbf16>
    %cst_8 = arith.constant dense<0.000000e+00> : vector<16x144xf32>
    %7 = tpu.matmul %4, %6, %cst_8 {dimension_numbers = #tpu.dot_dimension_numbers<[1], [0], [0], [1], [0, 0, 1, 1], [], []>} : vector<16x128xbf16>, vector<128x144xbf16>, vector<16x144xf32> -> vector<16x144xf32>
    %c0_9 = arith.constant 0 : index
    %c1 = arith.constant 1 : index
    %c0_10 = arith.constant 0 : index
    %8 = vector.load %arg1[%c0_9, %c1, %c0_10] : memref<1x18x128xbf16, #tpu.memory_space<vmem>>, vector<1x16x128xbf16>
    %9 = vector.shape_cast %8 : vector<1x16x128xbf16> to vector<16x128xbf16>
    %c1_11 = arith.constant 1 : index
    %c0_12 = arith.constant 0 : index
    %c0_13 = arith.constant 0 : index
    %10 = vector.load %arg2[%c1_11, %c0_12, %c0_13] : memref<3x128x144xbf16, #tpu.memory_space<vmem>>, vector<1x128x144xbf16>
    %11 = vector.shape_cast %10 : vector<1x128x144xbf16> to vector<128x144xbf16>
    %cst_14 = arith.constant dense<0.000000e+00> : vector<16x144xf32>
    %12 = tpu.matmul %9, %11, %cst_14 {dimension_numbers = #tpu.dot_dimension_numbers<[1], [0], [0], [1], [0, 0, 1, 1], [], []>} : vector<16x128xbf16>, vector<128x144xbf16>, vector<16x144xf32> -> vector<16x144xf32>
    %13 = arith.addf %7, %12 : vector<16x144xf32>
    %c0_15 = arith.constant 0 : index
    %c2 = arith.constant 2 : index
    %c0_16 = arith.constant 0 : index
    %14 = vector.load %arg1[%c0_15, %c2, %c0_16] : memref<1x18x128xbf16, #tpu.memory_space<vmem>>, vector<1x16x128xbf16>
    %15 = vector.shape_cast %14 : vector<1x16x128xbf16> to vector<16x128xbf16>
    %c2_17 = arith.constant 2 : index
    %c0_18 = arith.constant 0 : index
    %c0_19 = arith.constant 0 : index
    %16 = vector.load %arg2[%c2_17, %c0_18, %c0_19] : memref<3x128x144xbf16, #tpu.memory_space<vmem>>, vector<1x128x144xbf16>
    %17 = vector.shape_cast %16 : vector<1x128x144xbf16> to vector<128x144xbf16>
    %cst_20 = arith.constant dense<0.000000e+00> : vector<16x144xf32>
    %18 = tpu.matmul %15, %17, %cst_20 {dimension_numbers = #tpu.dot_dimension_numbers<[1], [0], [0], [1], [0, 0, 1, 1], [], []>} : vector<16x128xbf16>, vector<128x144xbf16>, vector<16x144xf32> -> vector<16x144xf32>
    %19 = arith.addf %13, %18 : vector<16x144xf32>
    %c0_21 = arith.constant 0 : index
    %c0_22 = arith.constant 0 : index
    %20 = vector.load %arg3[%c0_21, %c0_22] : memref<1x144xf32, #tpu.memory_space<vmem>>, vector<1x144xf32>
    %21 = vector.broadcast %20 : vector<1x144xf32> to vector<16x144xf32>
    %22 = arith.addf %19, %21 : vector<16x144xf32>
    %cst_23 = arith.constant 0.000000e+00 : f32
    %23 = vector.broadcast %cst_23 : f32 to vector<16x144xf32>
    %24 = arith.maximumf %22, %23 : vector<16x144xf32>
    %25 = arith.truncf %24 : vector<16x144xf32> to vector<16x144xbf16>
    %c1_24 = arith.constant 1 : index
    %c0_25 = arith.constant 0 : index
    %26 = vector.load %arg7[%c1_24, %c0_25] : memref<18x144xbf16, #tpu.memory_space<vmem>>, vector<16x144xbf16>
    tpu.vector_store %arg7[%c1_24, %c0_25], %25 {strides = array<i32>} : memref<18x144xbf16, #tpu.memory_space<vmem>>, vector<16x144xbf16>,
    %c0_26 = arith.constant 0 : index
    %c0_27 = arith.constant 0 : index
    %27 = vector.load %arg7[%c0_26, %c0_27] : memref<18x144xbf16, #tpu.memory_space<vmem>>, vector<16x144xbf16>
    %c0_28 = arith.constant 0 : index
    %c0_29 = arith.constant 0 : index
    %c0_30 = arith.constant 0 : index
    %28 = vector.load %arg4[%c0_28, %c0_29, %c0_30] : memref<3x144x128xbf16, #tpu.memory_space<vmem>>, vector<1x144x128xbf16>
    %29 = vector.shape_cast %28 : vector<1x144x128xbf16> to vector<144x128xbf16>
    %cst_31 = arith.constant dense<0.000000e+00> : vector<16x128xf32>
    %30 = tpu.matmul %27, %29, %cst_31 {dimension_numbers = #tpu.dot_dimension_numbers<[1], [0], [0], [1], [0, 0, 1, 1], [], []>} : vector<16x144xbf16>, vector<144x128xbf16>, vector<16x128xf32> -> vector<16x128xf32>
    %c1_32 = arith.constant 1 : index
    %c0_33 = arith.constant 0 : index
    %31 = vector.load %arg7[%c1_32, %c0_33] : memref<18x144xbf16, #tpu.memory_space<vmem>>, vector<16x144xbf16>
    %c1_34 = arith.constant 1 : index
    %c0_35 = arith.constant 0 : index
    %c0_36 = arith.constant 0 : index
    %32 = vector.load %arg4[%c1_34, %c0_35, %c0_36] : memref<3x144x128xbf16, #tpu.memory_space<vmem>>, vector<1x144x128xbf16>
    %33 = vector.shape_cast %32 : vector<1x144x128xbf16> to vector<144x128xbf16>
    %cst_37 = arith.constant dense<0.000000e+00> : vector<16x128xf32>
    %34 = tpu.matmul %31, %33, %cst_37 {dimension_numbers = #tpu.dot_dimension_numbers<[1], [0], [0], [1], [0, 0, 1, 1], [], []>} : vector<16x144xbf16>, vector<144x128xbf16>, vector<16x128xf32> -> vector<16x128xf32>
    %35 = arith.addf %30, %34 : vector<16x128xf32>
    %c2_38 = arith.constant 2 : index
    %c0_39 = arith.constant 0 : index
    %36 = vector.load %arg7[%c2_38, %c0_39] : memref<18x144xbf16, #tpu.memory_space<vmem>>, vector<16x144xbf16>
    %c2_40 = arith.constant 2 : index
    %c0_41 = arith.constant 0 : index
    %c0_42 = arith.constant 0 : index
    %37 = vector.load %arg4[%c2_40, %c0_41, %c0_42] : memref<3x144x128xbf16, #tpu.memory_space<vmem>>, vector<1x144x128xbf16>
    %38 = vector.shape_cast %37 : vector<1x144x128xbf16> to vector<144x128xbf16>
    %cst_43 = arith.constant dense<0.000000e+00> : vector<16x128xf32>
    %39 = tpu.matmul %36, %38, %cst_43 {dimension_numbers = #tpu.dot_dimension_numbers<[1], [0], [0], [1], [0, 0, 1, 1], [], []>} : vector<16x144xbf16>, vector<144x128xbf16>, vector<16x128xf32> -> vector<16x128xf32>
    %40 = arith.addf %35, %39 : vector<16x128xf32>
    %c0_44 = arith.constant 0 : index
    %c0_45 = arith.constant 0 : index
    %41 = vector.load %arg5[%c0_44, %c0_45] : memref<1x128xf32, #tpu.memory_space<vmem>>, vector<1x128xf32>
    %42 = vector.broadcast %41 : vector<1x128xf32> to vector<16x128xf32>
    %43 = arith.addf %40, %42 : vector<16x128xf32>
    %c0_46 = arith.constant 0 : index
    %c1_47 = arith.constant 1 : index
    %c0_48 = arith.constant 0 : index
    %44 = vector.load %arg1[%c0_46, %c1_47, %c0_48] : memref<1x18x128xbf16, #tpu.memory_space<vmem>>, vector<1x16x128xbf16>
    %45 = vector.shape_cast %44 : vector<1x16x128xbf16> to vector<16x128xbf16>
    %46 = arith.extf %45 : vector<16x128xbf16> to vector<16x128xf32>
    %47 = arith.addf %43, %46 : vector<16x128xf32>
    %cst_49 = arith.constant 0.000000e+00 : f32
    %48 = vector.broadcast %cst_49 : f32 to vector<16x128xf32>
    %49 = arith.maximumf %47, %48 : vector<16x128xf32>
    %50 = arith.truncf %49 : vector<16x128xf32> to vector<16x128xbf16>
    %c0_50 = arith.constant 0 : index
    %c0_51 = arith.constant 0 : index
    %c0_52 = arith.constant 0 : index
    %51 = vector.load %arg6[%c0_50, %c0_51, %c0_52] : memref<1x16x128xbf16, #tpu.memory_space<vmem>>, vector<1x16x128xbf16>
    %52 = vector.shape_cast %51 : vector<1x16x128xbf16> to vector<16x128xbf16>
    %53 = vector.shape_cast %50 : vector<16x128xbf16> to vector<1x16x128xbf16>
    tpu.vector_store %arg6[%c0_50, %c0_51, %c0_52], %53 {strides = array<i32>} : memref<1x16x128xbf16, #tpu.memory_space<vmem>>, vector<1x16x128xbf16>,
    return
  }
  func.func @transform_0(%arg0: i32) -> (i32, i32, i32) {
    %c0_i32 = arith.constant 0 : i32
    %c0_i32_0 = arith.constant 0 : i32
    %c0_i32_1 = arith.constant 0 : i32
    return %arg0, %c0_i32, %c0_i32_0 : i32, i32, i32
  }
  func.func @transform_1(%arg0: i32) -> (i32, i32, i32) {
    %c0_i32 = arith.constant 0 : i32
    %c0_i32_0 = arith.constant 0 : i32
    %c0_i32_1 = arith.constant 0 : i32
    %c0_i32_2 = arith.constant 0 : i32
    return %c0_i32, %c0_i32_0, %c0_i32_1 : i32, i32, i32
  }
  func.func @transform_2(%arg0: i32) -> (i32, i32) {
    %c0_i32 = arith.constant 0 : i32
    %c0_i32_0 = arith.constant 0 : i32
    %c0_i32_1 = arith.constant 0 : i32
    return %c0_i32, %c0_i32_0 : i32, i32
  }
  func.func @transform_3(%arg0: i32) -> (i32, i32, i32) {
    %c0_i32 = arith.constant 0 : i32
    %c0_i32_0 = arith.constant 0 : i32
    %c0_i32_1 = arith.constant 0 : i32
    %c0_i32_2 = arith.constant 0 : i32
    return %c0_i32, %c0_i32_0, %c0_i32_1 : i32, i32, i32
  }
  func.func @transform_4(%arg0: i32) -> (i32, i32) {
    %c0_i32 = arith.constant 0 : i32
    %c0_i32_0 = arith.constant 0 : i32
    %c0_i32_1 = arith.constant 0 : i32
    return %c0_i32, %c0_i32_0 : i32, i32
  }
  func.func @transform_5(%arg0: i32) -> (i32, i32, i32) {
    %c0_i32 = arith.constant 0 : i32
    %c0_i32_0 = arith.constant 0 : i32
    %c0_i32_1 = arith.constant 0 : i32
    return %arg0, %c0_i32, %c0_i32_0 : i32, i32, i32
  }
}

</mosaic_0001>

<llo_original>
// kernel: tpu_custom_call.1
$region0: #{tpu_custom_call.1}
  #allocation0 [shape = 'u32[]', space=smem, size = 0x4, offset = 0x4, fixed_abs, tag = 'smem constant byte address 0x4 - core index']
  #allocation1 [shape = 'u32[144,128]{1,0:T(1,128)}', space=vmem, size = 0x12000, scoped, tag = 'internal scratch']
  #allocation2 [shape = 'bf16[18,144]{1,0:T(8,128)(2,1)}', space=vmem, size = 0x3000, scoped, tag = 'scratch operand']
  %s0 = inlined_call_operand.vmem [shape: bf16[2,18,128], index: 0, kind: input, shape index: {}]
  %s1 = inlined_call_operand.vmem [shape: bf16[3,128,144], index: 1, kind: input, shape index: {}]
  %s2 = inlined_call_operand.vmem [shape: f32[1,144], index: 2, kind: input, shape index: {}]
  %s3 = inlined_call_operand.vmem [shape: bf16[3,144,128], index: 3, kind: input, shape index: {}]
  %s4 = inlined_call_operand.vmem [shape: f32[1,128], index: 4, kind: input, shape index: {}]
  %s5 = inlined_call_operand.hbm [shape: bf16[2,16,128], index: 5, kind: output, shape index: {}]
  %s6 = sld [smem:[#allocation0]]
  $region53: #{tpu_custom_call.1} parent=0
    _
  %s8 = ssub.s32 1, %s6
  %s9 = scalar_select 0, %s8, %s6
  $region1: #{tpu_custom_call.1} parent=0
    #allocation3 [shape = 'u8[8192]{0}', space=vmem, size = 0x2000, scoped, tag = 'output window, operand 0']
    #allocation4 [shape = 's32[2]{0}', space=sflag, size = 0x8, scoped, tag = 'scoped memory for tpu_custom_call.1']
    %10 = vsyncpa [#allocation4], 0
    %s11 = scalar_lea.sflag [#allocation4], 1
    %12 = vsyncpa %s11, 0
    loop: start=0, step=1, limit=4
    $region2: #{tpu_custom_call.1} parent=1 // loop_pre_header
      _
    $region3: #{tpu_custom_call.1} parent=1 // loop_header
      %s14 = sphi 0, %s18
      %p15 = scmp.ge.s32.totalorder %s14, 4
      %s24 = sphi 0, %s26
      %s27 = sphi 0, %s24
      %s28 = sphi 0, %s27
      %s44 = sphi 0, %s28
      %s48 = sphi 0, %s48
      %s50 = sphi 0, %s48
      %s51 = sphi 0, %s50
      %s65 = sphi 0, %s51
      %s69 = sphi 0, %s69
      %s71 = sphi 0, %s69
      %s72 = sphi 0, %s71
      %s86 = sphi 0, %s72
      %s90 = sphi 0, %s90
      %s92 = sphi 0, %s90
      %s93 = sphi 0, %s92
      %s107 = sphi 0, %s93
      %s111 = sphi 0, %s111
      %s113 = sphi 0, %s111
      %s114 = sphi 0, %s113
      %s128 = sphi 0, %s114
      %s134 = sphi 0, %s136
      %s137 = sphi 0, %s134
      %s138 = sphi 0, %s137
      %s154 = sphi 0, %s138
    $region4: #{tpu_custom_call.1} parent=1 // loop_header_branch
      %17 = sbr.rel (%p15) target = $region8
    $region5: #{tpu_custom_call.1} parent=1 // loop_body
      %s19 = ssub.s32 %s14, 1
      %s20 = ssub.s32 %s14, 2
      %s21 = sadd.s32 %s14, 1
      %s22 = ssub.s32 %s14, %s21
      %p23 = scmp.eq.s32.totalorder %s22, 0
      %s25 = sadd.s32 %s24, 1
      %s26 = scalar_select %p23, %s24, %s25
      %p29 = pneg %p23
      %p30 = scmp.eq.s32.totalorder %s14, 1
      %p31 = por %p29, %p30
      %p32 = scmp.ne.s32.totalorder %s24, %s27
      %p33 = scmp.eq.s32.totalorder %s14, 0
      %p34 = por %p32, %p33
      %p35 = scmp.ne.s32.totalorder %s24, %s27
      %p36 = scmp.eq.s32.totalorder %s19, 1
      %p37 = por %p35, %p36
      %p38 = scmp.ne.s32.totalorder %s27, %s28
      %p39 = scmp.eq.s32.totalorder %s19, 0
      %p40 = por %p38, %p39
      %p41 = scmp.ne.s32.totalorder %s27, %s28
      %p42 = scmp.eq.s32.totalorder %s20, 1
      %p43 = por %p41, %p42
      %p45 = scmp.ne.s32.totalorder %s28, %s44
      %p46 = scmp.eq.s32.totalorder %s20, 0
      %p47 = por %p45, %p46
      %s49 = sadd.s32 %s48, 1
      %p52 = scmp.eq.s32.totalorder %s14, 1
      %p53 = scmp.ne.s32.totalorder %s48, %s50
      %p54 = scmp.eq.s32.totalorder %s14, 0
      %p55 = por %p53, %p54
      %p56 = scmp.ne.s32.totalorder %s48, %s50
      %p57 = scmp.eq.s32.totalorder %s19, 1
      %p58 = por %p56, %p57
      %p59 = scmp.ne.s32.totalorder %s50, %s51
      %p60 = scmp.eq.s32.totalorder %s19, 0
      %p61 = por %p59, %p60
      %p62 = scmp.ne.s32.totalorder %s50, %s51
      %p63 = scmp.eq.s32.totalorder %s20, 1
      %p64 = por %p62, %p63
      %p66 = scmp.ne.s32.totalorder %s51, %s65
      %p67 = scmp.eq.s32.totalorder %s20, 0
      %p68 = por %p66, %p67
      %s70 = sadd.s32 %s69, 1
      %p73 = scmp.eq.s32.totalorder %s14, 1
      %p74 = scmp.ne.s32.totalorder %s69, %s71
      %p75 = scmp.eq.s32.totalorder %s14, 0
      %p76 = por %p74, %p75
      %p77 = scmp.ne.s32.totalorder %s69, %s71
      %p78 = scmp.eq.s32.totalorder %s19, 1
      %p79 = por %p77, %p78
      %p80 = scmp.ne.s32.totalorder %s71, %s72
      %p81 = scmp.eq.s32.totalorder %s19, 0
      %p82 = por %p80, %p81
      %p83 = scmp.ne.s32.totalorder %s71, %s72
      %p84 = scmp.eq.s32.totalorder %s20, 1
      %p85 = por %p83, %p84
      %p87 = scmp.ne.s32.totalorder %s72, %s86
      %p88 = scmp.eq.s32.totalorder %s20, 0
      %p89 = por %p87, %p88
      %s91 = sadd.s32 %s90, 1
      %p94 = scmp.eq.s32.totalorder %s14, 1
      %p95 = scmp.ne.s32.totalorder %s90, %s92
      %p96 = scmp.eq.s32.totalorder %s14, 0
      %p97 = por %p95, %p96
      %p98 = scmp.ne.s32.totalorder %s90, %s92
      %p99 = scmp.eq.s32.totalorder %s19, 1
      %p100 = por %p98, %p99
      %p101 = scmp.ne.s32.totalorder %s92, %s93
      %p102 = scmp.eq.s32.totalorder %s19, 0
      %p103 = por %p101, %p102
      %p104 = scmp.ne.s32.totalorder %s92, %s93
      %p105 = scmp.eq.s32.totalorder %s20, 1
      %p106 = por %p104, %p105
      %p108 = scmp.ne.s32.totalorder %s93, %s107
      %p109 = scmp.eq.s32.totalorder %s20, 0
      %p110 = por %p108, %p109
      %s112 = sadd.s32 %s111, 1
      %p115 = scmp.eq.s32.totalorder %s14, 1
      %p116 = scmp.ne.s32.totalorder %s111, %s113
      %p117 = scmp.eq.s32.totalorder %s14, 0
      %p118 = por %p116, %p117
      %p119 = scmp.ne.s32.totalorder %s111, %s113
      %p120 = scmp.eq.s32.totalorder %s19, 1
      %p121 = por %p119, %p120
      %p122 = scmp.ne.s32.totalorder %s113, %s114
      %p123 = scmp.eq.s32.totalorder %s19, 0
      %p124 = por %p122, %p123
      %p125 = scmp.ne.s32.totalorder %s113, %s114
      %p126 = scmp.eq.s32.totalorder %s20, 1
      %p127 = por %p125, %p126
      %p129 = scmp.ne.s32.totalorder %s114, %s128
      %p130 = scmp.eq.s32.totalorder %s20, 0
      %p131 = por %p129, %p130
      %s132 = ssub.s32 %s14, %s21
      %p133 = scmp.eq.s32.totalorder %s132, 0
      %s135 = sadd.s32 %s134, 1
      %s136 = scalar_select %p133, %s134, %s135
      %p139 = pneg %p133
      %p140 = scmp.eq.s32.totalorder %s14, 1
      %p141 = por %p139, %p140
      %p142 = scmp.ne.s32.totalorder %s134, %s137
      %p143 = scmp.eq.s32.totalorder %s14, 0
      %p144 = por %p142, %p143
      %p145 = scmp.ne.s32.totalorder %s134, %s137
      %p146 = scmp.eq.s32.totalorder %s19, 1
      %p147 = por %p145, %p146
      %p148 = scmp.ne.s32.totalorder %s137, %s138
      %p149 = scmp.eq.s32.totalorder %s19, 0
      %p150 = por %p148, %p149
      %p151 = scmp.ne.s32.totalorder %s137, %s138
      %p152 = scmp.eq.s32.totalorder %s20, 1
      %p153 = por %p151, %p152
      %p155 = scmp.ne.s32.totalorder %s138, %s154
      %p156 = scmp.eq.s32.totalorder %s20, 0
      %p157 = por %p155, %p156
      %p158 = scmp.le.s32.totalorder 1, %s14
      %p159 = scmp.lt.s32.totalorder %s14, 3
      %p160 = pnand %p158, %p159
      %p161 = pneg %p160
      // Predicated region
      $region9: #{tpu_custom_call.1} parent=5 // pred_check
        _
      $region10: #{tpu_custom_call.1} parent=5 // pred_check_branch
        %163 = sbr.rel (%p160) target = $region12
      $region11: #{tpu_custom_call.1} parent=5 // pred_region
        %s164 = ssub.s32 %s14, 1
        // Predicated region
        $region13: #{tpu_custom_call.1} parent=11 // pred_check
          %p165 = pneg %p61
        $region14: #{tpu_custom_call.1} parent=11 // pred_check_branch
          %167 = sbr.rel (%p165) target = $region16
        $region15: #{tpu_custom_call.1} parent=11 // pred_region
          _
        $region16: #{tpu_custom_call.1} parent=11 // pred_fallthru
          _
        // Predicated region
        $region17: #{tpu_custom_call.1} parent=11 // pred_check
          %p168 = pneg %p82
        $region18: #{tpu_custom_call.1} parent=11 // pred_check_branch
          %170 = sbr.rel (%p168) target = $region20
        $region19: #{tpu_custom_call.1} parent=11 // pred_region
          _
        $region20: #{tpu_custom_call.1} parent=11 // pred_fallthru
          _
        // Predicated region
        $region21: #{tpu_custom_call.1} parent=11 // pred_check
          %p171 = pneg %p103
        $region22: #{tpu_custom_call.1} parent=11 // pred_check_branch
          %173 = sbr.rel (%p171) target = $region24
        $region23: #{tpu_custom_call.1} parent=11 // pred_region
          _
        $region24: #{tpu_custom_call.1} parent=11 // pred_fallthru
          _
        // Predicated region
        $region25: #{tpu_custom_call.1} parent=11 // pred_check
          %p174 = pneg %p124
        $region26: #{tpu_custom_call.1} parent=11 // pred_check_branch
          %176 = sbr.rel (%p174) target = $region28
        $region27: #{tpu_custom_call.1} parent=11 // pred_region
          _
        $region28: #{tpu_custom_call.1} parent=11 // pred_fallthru
          _
      $region12: #{tpu_custom_call.1} parent=5 // pred_fallthru
        _
      %p177 = scmp.lt.s32.totalorder %s14, 2
      // Predicated region
      $region29: #{tpu_custom_call.1} parent=5 // pred_check
        %p178 = pneg %p177
      $region30: #{tpu_custom_call.1} parent=5 // pred_check_branch
        %180 = sbr.rel (%p178) target = $region32
      $region31: #{tpu_custom_call.1} parent=5 // pred_region
        // Predicated region
        $region33: #{tpu_custom_call.1} parent=31 // pred_check
          %p181 = pneg %p34
        $region34: #{tpu_custom_call.1} parent=31 // pred_check_branch
          %183 = sbr.rel (%p181) target = $region36
        $region35: #{tpu_custom_call.1} parent=31 // pred_region
          %p184 = scmp.lt.s32.totalorder %s14, 1
          %s185 = scalar_select %p184, %s14, 1
          %s186 = smul.addr %s185, 3
          %s187 = smul.addr %s186, 4
          %s188 = scalar_lea.vmem %s0, %s187
        $region36: #{tpu_custom_call.1} parent=31 // pred_fallthru
          _
      $region32: #{tpu_custom_call.1} parent=5 // pred_fallthru
        _
      %p189 = scmp.le.s32.totalorder 1, %s14
      %p190 = scmp.lt.s32.totalorder %s14, 3
      %p191 = pnand %p189, %p190
      %p192 = pneg %p191
      // Predicated region
      $region37: #{tpu_custom_call.1} parent=5 // pred_check
        _
      $region38: #{tpu_custom_call.1} parent=5 // pred_check_branch
        %194 = sbr.rel (%p191) target = $region40
      $region39: #{tpu_custom_call.1} parent=5 // pred_region
        %s195 = ssub.s32 %s14, 1
        %p196 = scmp.lt.s32.totalorder %s19, 1
        %s197 = scalar_select %p196, %s19, 1
        %s198 = smul.addr %s197, 3
        %s199 = smul.addr %s198, 4
        %s200 = scalar_lea.vmem %s0, %s199
        %p201 = pneg %p40
        %p202 = pneg %p37
        %p203 = pneg %p61
        %p204 = pneg %p58
        %p205 = pneg %p82
        %p206 = pneg %p79
        %p207 = pneg %p103
        %p208 = pneg %p100
        %p209 = pneg %p124
        %p210 = pneg %p121
        %p211 = pneg %p150
        %p212 = pneg %p147
        %s213 = sand.u32 %s137, 1
        %s214 = scalar_lea.sflag [#allocation4], %s213
        %s215 = sand.u32 %s137, 1
        %s216 = smul.addr %s215, 8
        %s217 = scalar_lea.vmem [#allocation3], %s216
        %p218 = scmp.lt.s32.totalorder %s19, 1
        %s219 = scalar_select %p218, %s19, 1
        %s220 = smul.addr %s219, 3
        %s221 = smul.addr %s220, 4
        %s222 = scalar_lea.vmem %s0, %s221
        %vm224 = vcmask 1040384
        %vm225 = vsmask.f32 256
        %vm226 = vmand %vm224, %vm225
        %vm227 = vcmask 126980
        %vm228 = vsmask.f32 4352
        %vm229 = vmand %vm227, %vm228
        %vm230 = vmor %vm229, %vm226
        %v231 = vld [vmem:[#allocation2] sm:$0x11]
        %v232 = vsel %vm230, 0, %v231
        %233 = vst [vmem:[#allocation2] sm:$0x11] %v232
        %vm234 = vsmask.f32 7938
        %vm235 = vmand %vm224, %vm234
        %vm236 = vsmask.f32 7954
        %vm237 = vmand %vm227, %vm236
        %vm238 = vmor %vm237, %vm235
        %v239 = vld [vmem:[#allocation2 + $0x10] sm:$0x11]
        %v240 = vsel %vm238, 0, %v239
        %241 = vst [vmem:[#allocation2 + $0x10] sm:$0x11] %v240
        %v242 = vld [vmem:[%s222] sm:$0xf]
        %v243 = vld [vmem:[%s222 + $0x4] sm:$0xf]
        %v244 = vld [vmem:[%s1] sm:$0xff]
        %v245 = vld [vmem:[%s1 + $0x8] sm:$0xff]
        %v246 = vld [vmem:[%s1 + $0x10] sm:$0xff]
        %v247 = vld [vmem:[%s1 + $0x18] sm:$0xff]
        %v248 = vld [vmem:[%s1 + $0x20] sm:$0xff]
        %v249 = vld [vmem:[%s1 + $0x28] sm:$0xff]
        %v250 = vld [vmem:[%s1 + $0x30] sm:$0xff]
        %v251 = vld [vmem:[%s1 + $0x38] sm:$0xff]
        %v252 = vld [vmem:[%s1 + $0x40] sm:$0xff]
        %v253 = vld [vmem:[%s1 + $0x48] sm:$0xff]
        %v254 = vld [vmem:[%s1 + $0x50] sm:$0xff]
        %v255 = vld [vmem:[%s1 + $0x58] sm:$0xff]
        %v256 = vld [vmem:[%s1 + $0x60] sm:$0xff]
        %v257 = vld [vmem:[%s1 + $0x68] sm:$0xff]
        %v258 = vld [vmem:[%s1 + $0x70] sm:$0xff]
        %v259 = vld [vmem:[%s1 + $0x78] sm:$0xff]
        %v260 = vld [vmem:[%s222 + $0x8] sm:$0x1]
        %s261 = scalar_lea.vmem %s1, 128
        %v262 = vld [vmem:[%s261] sm:$0xff]
        %v263 = vld [vmem:[%s261 + $0x8] sm:$0xff]
        %v264 = vld [vmem:[%s261 + $0x10] sm:$0xff]
        %v265 = vld [vmem:[%s261 + $0x18] sm:$0xff]
        %v266 = vld [vmem:[%s261 + $0x20] sm:$0xff]
        %v267 = vld [vmem:[%s261 + $0x28] sm:$0xff]
        %v268 = vld [vmem:[%s261 + $0x30] sm:$0xff]
        %v269 = vld [vmem:[%s261 + $0x38] sm:$0xff]
        %v270 = vld [vmem:[%s261 + $0x40] sm:$0xff]
        %v271 = vld [vmem:[%s261 + $0x48] sm:$0xff]
        %v272 = vld [vmem:[%s261 + $0x50] sm:$0xff]
        %v273 = vld [vmem:[%s261 + $0x58] sm:$0xff]
        %v274 = vld [vmem:[%s261 + $0x60] sm:$0xff]
        %v275 = vld [vmem:[%s261 + $0x68] sm:$0xff]
        %v276 = vld [vmem:[%s261 + $0x70] sm:$0xff]
        %v277 = vld [vmem:[%s261 + $0x78] sm:$0xff]
        %v281 = vunpack.c.l.b16 %v242
        %v282 = vunpack.c.l.b16 %v243
        %v283 = vunpack.c.l.b16 %v260
        %v284 = vpack.c.b16 %v282, %v281
        %v285 = vpack.c.b16 %v283, %v283
        %vm286 = vsmask.f32 7424
        %v288 = vshrl.u32 %v284, 16
        %v290 = vshll.u32 %v284, 16
        %v292 = vrot.slane %v290, 1
        %v293 = vor.u32 %v288, %v292
        %v295 = vshll.u32 %v285, 16
        %v297 = vrot.slane %v295, 1
        %v298 = vsel %vm286, %v293, %v297
        %v316 = vunpack.c.l.b16 %v262
        %v317 = vunpack.c.h.b16 %v262
        %v318 = vunpack.c.l.b16 %v263
        %v319 = vunpack.c.h.b16 %v263
        %v320 = vunpack.c.l.b16 %v264
        %v321 = vunpack.c.h.b16 %v264
        %v322 = vunpack.c.l.b16 %v265
        %v323 = vunpack.c.h.b16 %v265
        %v324 = vunpack.c.l.b16 %v266
        %v325 = vunpack.c.h.b16 %v266
        %v326 = vunpack.c.l.b16 %v267
        %v327 = vunpack.c.h.b16 %v267
        %v328 = vunpack.c.l.b16 %v268
        %v329 = vunpack.c.h.b16 %v268
        %v330 = vunpack.c.l.b16 %v269
        %v331 = vunpack.c.h.b16 %v269
        %v332 = vunpack.c.l.b16 %v270
        %v333 = vunpack.c.h.b16 %v270
        %v334 = vunpack.c.l.b16 %v271
        %v335 = vunpack.c.h.b16 %v271
        %v336 = vunpack.c.l.b16 %v272
        %v337 = vunpack.c.h.b16 %v272
        %v338 = vunpack.c.l.b16 %v273
        %v339 = vunpack.c.h.b16 %v273
        %v340 = vunpack.c.l.b16 %v274
        %v341 = vunpack.c.h.b16 %v274
        %v342 = vunpack.c.l.b16 %v275
        %v343 = vunpack.c.h.b16 %v275
        %v344 = vunpack.c.l.b16 %v276
        %v345 = vunpack.c.h.b16 %v276
        %v346 = vunpack.c.l.b16 %v277
        %v347 = vunpack.c.h.b16 %v277
        %v348 = vpack.c.b16 %v318, %v316
        %v349 = vpack.c.b16 %v319, %v317
        %v350 = vpack.c.b16 %v322, %v320
        %v351 = vpack.c.b16 %v323, %v321
        %v352 = vpack.c.b16 %v326, %v324
        %v353 = vpack.c.b16 %v327, %v325
        %v354 = vpack.c.b16 %v330, %v328
        %v355 = vpack.c.b16 %v331, %v329
        %v356 = vpack.c.b16 %v334, %v332
        %v357 = vpack.c.b16 %v335, %v333
        %v358 = vpack.c.b16 %v338, %v336
        %v359 = vpack.c.b16 %v339, %v337
        %v360 = vpack.c.b16 %v342, %v340
        %v361 = vpack.c.b16 %v343, %v341
        %v362 = vpack.c.b16 %v346, %v344
        %v363 = vpack.c.b16 %v347, %v345
        %380 = vmatprep.subr.bf16.mxu0 %v363
        %381 = vmatpush1.bf16.msra.mxu0 %v362
        %382 = vmatprep.subr.bf16.mxu0 %v361
        %383 = vmatpush1.bf16.msra.mxu0 %v360
        %384 = vmatprep.subr.bf16.mxu0 %v359
        %385 = vmatpush1.bf16.msra.mxu0 %v358
        %386 = vmatprep.subr.bf16.mxu0 %v357
        %387 = vmatpush1.bf16.msra.mxu0 %v356
        %388 = vmatprep.subr.bf16.mxu0 %v355
        %389 = vmatpush1.bf16.msra.mxu0 %v354
        %390 = vmatprep.subr.bf16.mxu0 %v353
        %391 = vmatpush1.bf16.msra.mxu0 %v352
        %392 = vmatprep.subr.bf16.mxu0 %v351
        %393 = vmatpush1.bf16.msra.mxu0 %v350
        %394 = vmatprep.subr.bf16.mxu0 %v349
        %395 = vmatpush1.bf16.msra.mxu0 %v348
        %396 = vmatprep.subr.bf16.mxu0 0
        %397 = vmatpush2.bf16.msra.mxu0 0
        %398 = vmatprep.subr.bf16.mxu0 0
        %399 = vmatpush2.bf16.msra.mxu0 0
        %400 = vmatprep.subr.bf16.mxu0 0
        %401 = vmatpush2.bf16.msra.mxu0 0
        %402 = vmatprep.subr.bf16.mxu0 0
        %403 = vmatpush2.bf16.msra.mxu0 0
        %404 = vmatprep.subr.bf16.mxu0 0
        %405 = vmatpush2.bf16.msra.mxu0 0
        %406 = vmatprep.subr.bf16.mxu0 0
        %407 = vmatpush2.bf16.msra.mxu0 0
        %408 = vmatprep.subr.bf16.mxu0 0
        %409 = vmatpush2.bf16.msra.mxu0 0
        %410 = vmatprep.subr.bf16.mxu0 0
        %411 = vmatpush2.bf16.msra.mxu0 0
        %412 = vmatprep.mubr.bf16.mxu0 0
        %413 = vmatmul.mubr.bf16.gmra.mxu0 %v298
        %v414 = vpop.f32.mrf.mxu0
        %v415 = vadd.f32 0.0, %v414
        %v416 = vpop.f32.mrf.mxu0
        %v417 = vadd.f32 0.0, %v416
        %v418 = vpop.f32.mrf.mxu0
        %v419 = vadd.f32 0.0, %v418
        %v420 = vpop.f32.mrf.mxu0
        %v421 = vadd.f32 0.0, %v420
        %422 = vdwg.mxu0
        %v440 = vunpack.c.l.b16 %v244
        %v441 = vunpack.c.h.b16 %v244
        %v442 = vunpack.c.l.b16 %v245
        %v443 = vunpack.c.h.b16 %v245
        %v444 = vunpack.c.l.b16 %v246
        %v445 = vunpack.c.h.b16 %v246
        %v446 = vunpack.c.l.b16 %v247
        %v447 = vunpack.c.h.b16 %v247
        %v448 = vunpack.c.l.b16 %v248
        %v449 = vunpack.c.h.b16 %v248
        %v450 = vunpack.c.l.b16 %v249
        %v451 = vunpack.c.h.b16 %v249
        %v452 = vunpack.c.l.b16 %v250
        %v453 = vunpack.c.h.b16 %v250
        %v454 = vunpack.c.l.b16 %v251
        %v455 = vunpack.c.h.b16 %v251
        %v456 = vunpack.c.l.b16 %v252
        %v457 = vunpack.c.h.b16 %v252
        %v458 = vunpack.c.l.b16 %v253
        %v459 = vunpack.c.h.b16 %v253
        %v460 = vunpack.c.l.b16 %v254
        %v461 = vunpack.c.h.b16 %v254
        %v462 = vunpack.c.l.b16 %v255
        %v463 = vunpack.c.h.b16 %v255
        %v464 = vunpack.c.l.b16 %v256
        %v465 = vunpack.c.h.b16 %v256
        %v466 = vunpack.c.l.b16 %v257
        %v467 = vunpack.c.h.b16 %v257
        %v468 = vunpack.c.l.b16 %v258
        %v469 = vunpack.c.h.b16 %v258
        %v470 = vunpack.c.l.b16 %v259
        %v471 = vunpack.c.h.b16 %v259
        %v472 = vpack.c.b16 %v442, %v440
        %v473 = vpack.c.b16 %v443, %v441
        %v474 = vpack.c.b16 %v446, %v444
        %v475 = vpack.c.b16 %v447, %v445
        %v476 = vpack.c.b16 %v450, %v448
        %v477 = vpack.c.b16 %v451, %v449
        %v478 = vpack.c.b16 %v454, %v452
        %v479 = vpack.c.b16 %v455, %v453
        %v480 = vpack.c.b16 %v458, %v456
        %v481 = vpack.c.b16 %v459, %v457
        %v482 = vpack.c.b16 %v462, %v460
        %v483 = vpack.c.b16 %v463, %v461
        %v484 = vpack.c.b16 %v466, %v464
        %v485 = vpack.c.b16 %v467, %v465
        %v486 = vpack.c.b16 %v470, %v468
        %v487 = vpack.c.b16 %v471, %v469
        %504 = vmatprep.subr.bf16.mxu0 %v487
        %505 = vmatpush1.bf16.msra.mxu0 %v486
        %506 = vmatprep.subr.bf16.mxu0 %v485
        %507 = vmatpush1.bf16.msra.mxu0 %v484
        %508 = vmatprep.subr.bf16.mxu0 %v483
        %509 = vmatpush1.bf16.msra.mxu0 %v482
        %510 = vmatprep.subr.bf16.mxu0 %v481
        %511 = vmatpush1.bf16.msra.mxu0 %v480
        %512 = vmatprep.subr.bf16.mxu0 %v479
        %513 = vmatpush1.bf16.msra.mxu0 %v478
        %514 = vmatprep.subr.bf16.mxu0 %v477
        %515 = vmatpush1.bf16.msra.mxu0 %v476
        %516 = vmatprep.subr.bf16.mxu0 %v475
        %517 = vmatpush1.bf16.msra.mxu0 %v474
        %518 = vmatprep.subr.bf16.mxu0 %v473
        %519 = vmatpush1.bf16.msra.mxu0 %v472
        %520 = vmatprep.subr.bf16.mxu0 0
        %521 = vmatpush2.bf16.msra.mxu0 0
        %522 = vmatprep.subr.bf16.mxu0 0
        %523 = vmatpush2.bf16.msra.mxu0 0
        %524 = vmatprep.subr.bf16.mxu0 0
        %525 = vmatpush2.bf16.msra.mxu0 0
        %526 = vmatprep.subr.bf16.mxu0 0
        %527 = vmatpush2.bf16.msra.mxu0 0
        %528 = vmatprep.subr.bf16.mxu0 0
        %529 = vmatpush2.bf16.msra.mxu0 0
        %530 = vmatprep.subr.bf16.mxu0 0
        %531 = vmatpush2.bf16.msra.mxu0 0
        %532 = vmatprep.subr.bf16.mxu0 0
        %533 = vmatpush2.bf16.msra.mxu0 0
        %534 = vmatprep.subr.bf16.mxu0 0
        %535 = vmatpush2.bf16.msra.mxu0 0
        %536 = vmatprep.mubr.bf16.mxu0 0
        %537 = vmatmul.mubr.bf16.gmra.mxu0 %v284
        %v538 = vpop.f32.mrf.mxu0
        %v539 = vadd.f32 %v415, %v538
        %v540 = vpop.f32.mrf.mxu0
        %v541 = vadd.f32 %v417, %v540
        %v542 = vpop.f32.mrf.mxu0
        %v543 = vadd.f32 %v419, %v542
        %v544 = vpop.f32.mrf.mxu0
        %v545 = vadd.f32 %v421, %v544
        %546 = vdwg.mxu0
        %v547 = vld [vmem:[%s222] sm:$0xe]
        %s548 = scalar_lea.vmem %s1, 256
        %v549 = vld [vmem:[%s548] sm:$0xff]
        %v550 = vld [vmem:[%s548 + $0x8] sm:$0xff]
        %v551 = vld [vmem:[%s548 + $0x10] sm:$0xff]
        %v552 = vld [vmem:[%s548 + $0x18] sm:$0xff]
        %v553 = vld [vmem:[%s548 + $0x20] sm:$0xff]
        %v554 = vld [vmem:[%s548 + $0x28] sm:$0xff]
        %v555 = vld [vmem:[%s548 + $0x30] sm:$0xff]
        %v556 = vld [vmem:[%s548 + $0x38] sm:$0xff]
        %v557 = vld [vmem:[%s548 + $0x40] sm:$0xff]
        %v558 = vld [vmem:[%s548 + $0x48] sm:$0xff]
        %v559 = vld [vmem:[%s548 + $0x50] sm:$0xff]
        %v560 = vld [vmem:[%s548 + $0x58] sm:$0xff]
        %v561 = vld [vmem:[%s548 + $0x60] sm:$0xff]
        %v562 = vld [vmem:[%s548 + $0x68] sm:$0xff]
        %v563 = vld [vmem:[%s548 + $0x70] sm:$0xff]
        %v564 = vld [vmem:[%s548 + $0x78] sm:$0xff]
        %v566 = vunpack.c.l.b16 %v547
        %v567 = vpack.c.b16 %v282, %v566
        %vm568 = vcmask 1046528
        %v569 = vrot.slane %v567, 1
        %v570 = vrot.slane %v285, 1
        %v571 = vsel %vm568, %v569, %v570
        %v589 = vunpack.c.l.b16 %v549
        %v590 = vunpack.c.h.b16 %v549
        %v591 = vunpack.c.l.b16 %v550
        %v592 = vunpack.c.h.b16 %v550
        %v593 = vunpack.c.l.b16 %v551
        %v594 = vunpack.c.h.b16 %v551
        %v595 = vunpack.c.l.b16 %v552
        %v596 = vunpack.c.h.b16 %v552
        %v597 = vunpack.c.l.b16 %v553
        %v598 = vunpack.c.h.b16 %v553
        %v599 = vunpack.c.l.b16 %v554
        %v600 = vunpack.c.h.b16 %v554
        %v601 = vunpack.c.l.b16 %v555
        %v602 = vunpack.c.h.b16 %v555
        %v603 = vunpack.c.l.b16 %v556
        %v604 = vunpack.c.h.b16 %v556
        %v605 = vunpack.c.l.b16 %v557
        %v606 = vunpack.c.h.b16 %v557
        %v607 = vunpack.c.l.b16 %v558
        %v608 = vunpack.c.h.b16 %v558
        %v609 = vunpack.c.l.b16 %v559
        %v610 = vunpack.c.h.b16 %v559
        %v611 = vunpack.c.l.b16 %v560
        %v612 = vunpack.c.h.b16 %v560
        %v613 = vunpack.c.l.b16 %v561
        %v614 = vunpack.c.h.b16 %v561
        %v615 = vunpack.c.l.b16 %v562
        %v616 = vunpack.c.h.b16 %v562
        %v617 = vunpack.c.l.b16 %v563
        %v618 = vunpack.c.h.b16 %v563
        %v619 = vunpack.c.l.b16 %v564
        %v620 = vunpack.c.h.b16 %v564
        %v621 = vpack.c.b16 %v591, %v589
        %v622 = vpack.c.b16 %v592, %v590
        %v623 = vpack.c.b16 %v595, %v593
        %v624 = vpack.c.b16 %v596, %v594
        %v625 = vpack.c.b16 %v599, %v597
        %v626 = vpack.c.b16 %v600, %v598
        %v627 = vpack.c.b16 %v603, %v601
        %v628 = vpack.c.b16 %v604, %v602
        %v629 = vpack.c.b16 %v607, %v605
        %v630 = vpack.c.b16 %v608, %v606
        %v631 = vpack.c.b16 %v611, %v609
        %v632 = vpack.c.b16 %v612, %v610
        %v633 = vpack.c.b16 %v615, %v613
        %v634 = vpack.c.b16 %v616, %v614
        %v635 = vpack.c.b16 %v619, %v617
        %v636 = vpack.c.b16 %v620, %v618
        %653 = vmatprep.subr.bf16.mxu0 %v636
        %654 = vmatpush1.bf16.msra.mxu0 %v635
        %655 = vmatprep.subr.bf16.mxu0 %v634
        %656 = vmatpush1.bf16.msra.mxu0 %v633
        %657 = vmatprep.subr.bf16.mxu0 %v632
        %658 = vmatpush1.bf16.msra.mxu0 %v631
        %659 = vmatprep.subr.bf16.mxu0 %v630
        %660 = vmatpush1.bf16.msra.mxu0 %v629
        %661 = vmatprep.subr.bf16.mxu0 %v628
        %662 = vmatpush1.bf16.msra.mxu0 %v627
        %663 = vmatprep.subr.bf16.mxu0 %v626
        %664 = vmatpush1.bf16.msra.mxu0 %v625
        %665 = vmatprep.subr.bf16.mxu0 %v624
        %666 = vmatpush1.bf16.msra.mxu0 %v623
        %667 = vmatprep.subr.bf16.mxu0 %v622
        %668 = vmatpush1.bf16.msra.mxu0 %v621
        %669 = vmatprep.subr.bf16.mxu0 0
        %670 = vmatpush2.bf16.msra.mxu0 0
        %671 = vmatprep.subr.bf16.mxu0 0
        %672 = vmatpush2.bf16.msra.mxu0 0
        %673 = vmatprep.subr.bf16.mxu0 0
        %674 = vmatpush2.bf16.msra.mxu0 0
        %675 = vmatprep.subr.bf16.mxu0 0
        %676 = vmatpush2.bf16.msra.mxu0 0
        %677 = vmatprep.subr.bf16.mxu0 0
        %678 = vmatpush2.bf16.msra.mxu0 0
        %679 = vmatprep.subr.bf16.mxu0 0
        %680 = vmatpush2.bf16.msra.mxu0 0
        %681 = vmatprep.subr.bf16.mxu0 0
        %682 = vmatpush2.bf16.msra.mxu0 0
        %683 = vmatprep.subr.bf16.mxu0 0
        %684 = vmatpush2.bf16.msra.mxu0 0
        %685 = vmatprep.mubr.bf16.mxu0 0
        %686 = vmatmul.mubr.bf16.gmra.mxu0 %v571
        %v687 = vpop.f32.mrf.mxu0
        %v688 = vadd.f32 0.0, %v687
        %v689 = vpop.f32.mrf.mxu0
        %v690 = vadd.f32 0.0, %v689
        %v691 = vpop.f32.mrf.mxu0
        %v692 = vadd.f32 0.0, %v691
        %v693 = vpop.f32.mrf.mxu0
        %v694 = vadd.f32 0.0, %v693
        %695 = vdwg.mxu0
        %v696 = vadd.f32 %v539, %v688
        %v697 = vadd.f32 %v541, %v690
        %v698 = vadd.f32 %v543, %v692
        %v699 = vadd.f32 %v545, %v694
        %v700 = vld [vmem:[%s2] sm:$0x3]
        %v702 = vlaneseq
        %v703 = vshrl.u32 %v702, 7
        %v704 = vsub.s32 0, %v703
        %v705 = vrot.slane %v700, %v704
        %v706 = vlaneseq
        %v707 = vshrl.u32 %v706, 7
        %v708 = vsub.s32 1, %v707
        %v709 = vrot.slane %v700, %v708
        %v712 = vadd.f32 %v696, %v705
        %v713 = vadd.f32 %v697, %v709
        %v714 = vadd.f32 %v698, %v705
        %v715 = vadd.f32 %v699, %v709
        %v716 = vmax.f32 %v712, 0.0
        %v717 = vmax.f32 %v713, 0.0
        %v718 = vmax.f32 %v714, 0.0
        %v719 = vmax.f32 %v715, 0.0
        %v720 = vpack.c.bf16 %v718, %v716
        %v721 = vpack.c.bf16 %v719, %v717
        %v724 = vunpack.c.l.b16 %v720
        %v725 = vunpack.c.l.b16 %v721
        %v726 = vunpack.c.h.b16 %v720
        %v727 = vunpack.c.h.b16 %v721
        %v728 = vpack.c.b16 %v725, %v724
        %v729 = vpack.c.b16 %v727, %v726
        %vm730 = vsmask.f32 4368
        %vm731 = vmor %vm225, %vm730
        %v733 = vshrl.u32 %v728, 16
        %v735 = vrot.slane %v733, 7
        %v736 = vshll.u32 %v728, 16
        %v738 = vor.u32 %v735, %v736
        %v739 = vrot.slane %v735, 4
        %v741 = vshrl.u32 %v729, 16
        %v743 = vrot.slane %v741, 7
        %v744 = vshll.u32 %v729, 16
        %v746 = vor.u32 %v743, %v744
        %v747 = vsel %vm731, %v739, %v746
        %v748 = vrot.slane %v743, 4
        %vm752 = vcmask 1043456
        %vm753 = vmand %vm752, %vm234
        %vm754 = vcmask 130052
        %vm755 = vmand %vm754, %vm236
        %vm756 = vmor %vm755, %vm753
        %v757 = vld [vmem:[#allocation2] sm:$0xff]
        %v758 = vsel %vm756, %v738, %v757
        %759 = vst [vmem:[#allocation2] sm:$0xff] %v758
        %vm760 = vcmask 1043456
        %vm761 = vcmask 130052
        %vm762 = vmor %vm761, %vm760
        %763 = vst.msk [vmem:[#allocation2 + $0x8] sm:$0xff] %vm762, %v747
        %v764 = vld [vmem:[#allocation2 + $0x10] sm:$0x11]
        %v765 = vsel %vm230, %v748, %v764
        %766 = vst [vmem:[#allocation2 + $0x10] sm:$0x11] %v765
        %v767 = vld [vmem:[#allocation2] sm:$0xff]
        %v768 = vld [vmem:[#allocation2 + $0x8] sm:$0xff]
        %v769 = vld [vmem:[%s3] sm:$0xf]
        %v770 = vld [vmem:[%s3 + $0x4] sm:$0xf]
        %v771 = vld [vmem:[%s3 + $0x8] sm:$0xf]
        %v772 = vld [vmem:[%s3 + $0xc] sm:$0xf]
        %v773 = vld [vmem:[%s3 + $0x10] sm:$0xf]
        %v774 = vld [vmem:[%s3 + $0x14] sm:$0xf]
        %v775 = vld [vmem:[%s3 + $0x18] sm:$0xf]
        %v776 = vld [vmem:[%s3 + $0x1c] sm:$0xf]
        %v777 = vld [vmem:[%s3 + $0x20] sm:$0xf]
        %v778 = vld [vmem:[%s3 + $0x24] sm:$0xf]
        %v779 = vld [vmem:[%s3 + $0x28] sm:$0xf]
        %v780 = vld [vmem:[%s3 + $0x2c] sm:$0xf]
        %v781 = vld [vmem:[%s3 + $0x30] sm:$0xf]
        %v782 = vld [vmem:[%s3 + $0x34] sm:$0xf]
        %v783 = vld [vmem:[%s3 + $0x38] sm:$0xf]
        %v784 = vld [vmem:[%s3 + $0x3c] sm:$0xf]
        %v785 = vld [vmem:[%s3 + $0x40] sm:$0xf]
        %v786 = vld [vmem:[%s3 + $0x44] sm:$0xf]
        %v787 = vld [vmem:[#allocation2 + $0x10] sm:$0x11]
        %s788 = scalar_lea.vmem %s3, 72
        %v789 = vld [vmem:[%s788] sm:$0xf]
        %v790 = vld [vmem:[%s788 + $0x4] sm:$0xf]
        %v791 = vld [vmem:[%s788 + $0x8] sm:$0xf]
        %v792 = vld [vmem:[%s788 + $0xc] sm:$0xf]
        %v793 = vld [vmem:[%s788 + $0x10] sm:$0xf]
        %v794 = vld [vmem:[%s788 + $0x14] sm:$0xf]
        %v795 = vld [vmem:[%s788 + $0x18] sm:$0xf]
        %v796 = vld [vmem:[%s788 + $0x1c] sm:$0xf]
        %v797 = vld [vmem:[%s788 + $0x20] sm:$0xf]
        %v798 = vld [vmem:[%s788 + $0x24] sm:$0xf]
        %v799 = vld [vmem:[%s788 + $0x28] sm:$0xf]
        %v800 = vld [vmem:[%s788 + $0x2c] sm:$0xf]
        %v801 = vld [vmem:[%s788 + $0x30] sm:$0xf]
        %v802 = vld [vmem:[%s788 + $0x34] sm:$0xf]
        %v803 = vld [vmem:[%s788 + $0x38] sm:$0xf]
        %v804 = vld [vmem:[%s788 + $0x3c] sm:$0xf]
        %v805 = vld [vmem:[%s788 + $0x40] sm:$0xf]
        %v806 = vld [vmem:[%s788 + $0x44] sm:$0xf]
        %v810 = vunpack.c.l.b16 %v767
        %v811 = vunpack.c.h.b16 %v767
        %v812 = vunpack.c.l.b16 %v768
        %v813 = vunpack.c.h.b16 %v768
        %v814 = vunpack.c.l.b16 %v787
        %v815 = vunpack.c.h.b16 %v787
        %v816 = vpack.c.b16 %v812, %v810
        %v817 = vpack.c.b16 %v813, %v811
        %v818 = vpack.c.b16 %v814, %v814
        %v819 = vpack.c.b16 %v815, %v815
        %v821 = vshrl.u32 %v816, 16
        %v823 = vshll.u32 %v816, 16
        %v825 = vrot.slane %v823, 1
        %v826 = vor.u32 %v821, %v825
        %v828 = vshll.u32 %v818, 16
        %v830 = vrot.slane %v828, 1
        %v831 = vsel %vm286, %v826, %v830
        %v833 = vshrl.u32 %v817, 16
        %v835 = vshll.u32 %v817, 16
        %v837 = vrot.slane %v835, 1
        %v838 = vor.u32 %v833, %v837
        %v840 = vshll.u32 %v819, 16
        %v842 = vrot.slane %v840, 1
        %v843 = vsel %vm286, %v838, %v842
        %v863 = vunpack.c.l.b16 %v789
        %v864 = vunpack.c.l.b16 %v790
        %v865 = vunpack.c.l.b16 %v791
        %v866 = vunpack.c.l.b16 %v792
        %v867 = vunpack.c.l.b16 %v793
        %v868 = vunpack.c.l.b16 %v794
        %v869 = vunpack.c.l.b16 %v795
        %v870 = vunpack.c.l.b16 %v796
        %v871 = vunpack.c.l.b16 %v797
        %v872 = vunpack.c.l.b16 %v798
        %v873 = vunpack.c.l.b16 %v799
        %v874 = vunpack.c.l.b16 %v800
        %v875 = vunpack.c.l.b16 %v801
        %v876 = vunpack.c.l.b16 %v802
        %v877 = vunpack.c.l.b16 %v803
        %v878 = vunpack.c.l.b16 %v804
        %v879 = vunpack.c.l.b16 %v805
        %v880 = vunpack.c.l.b16 %v806
        %v881 = vpack.c.b16 %v864, %v863
        %v882 = vpack.c.b16 %v866, %v865
        %v883 = vpack.c.b16 %v868, %v867
        %v884 = vpack.c.b16 %v870, %v869
        %v885 = vpack.c.b16 %v872, %v871
        %v886 = vpack.c.b16 %v874, %v873
        %v887 = vpack.c.b16 %v876, %v875
        %v888 = vpack.c.b16 %v878, %v877
        %v889 = vpack.c.b16 %v880, %v879
        %vm899 = vcmask 130048
        %v901 = vsel %vm899, %v843, 0
        %903 = vmatprep.subr.bf16.mxu0 0
        %904 = vmatpush1.bf16.msra.mxu0 %v888
        %905 = vmatprep.subr.bf16.mxu0 0
        %906 = vmatpush1.bf16.msra.mxu0 %v887
        %907 = vmatprep.subr.bf16.mxu0 0
        %908 = vmatpush1.bf16.msra.mxu0 %v886
        %909 = vmatprep.subr.bf16.mxu0 0
        %910 = vmatpush1.bf16.msra.mxu0 %v885
        %911 = vmatprep.subr.bf16.mxu0 0
        %912 = vmatpush1.bf16.msra.mxu0 %v884
        %913 = vmatprep.subr.bf16.mxu0 0
        %914 = vmatpush1.bf16.msra.mxu0 %v883
        %915 = vmatprep.subr.bf16.mxu0 0
        %916 = vmatpush1.bf16.msra.mxu0 %v882
        %917 = vmatprep.subr.bf16.mxu0 0
        %918 = vmatpush1.bf16.msra.mxu0 %v881
        %919 = vmatprep.subr.bf16.mxu0 0
        %920 = vmatpush2.bf16.msra.mxu0 0
        %921 = vmatprep.subr.bf16.mxu0 0
        %922 = vmatpush2.bf16.msra.mxu0 0
        %923 = vmatprep.subr.bf16.mxu0 0
        %924 = vmatpush2.bf16.msra.mxu0 0
        %925 = vmatprep.subr.bf16.mxu0 0
        %926 = vmatpush2.bf16.msra.mxu0 0
        %927 = vmatprep.subr.bf16.mxu0 0
        %928 = vmatpush2.bf16.msra.mxu0 0
        %929 = vmatprep.subr.bf16.mxu0 0
        %930 = vmatpush2.bf16.msra.mxu0 0
        %931 = vmatprep.subr.bf16.mxu0 0
        %932 = vmatpush2.bf16.msra.mxu0 0
        %933 = vmatprep.subr.bf16.mxu0 0
        %934 = vmatpush2.bf16.msra.mxu0 %v889
        %935 = vmatprep.mubr.bf16.mxu0 %v901
        %936 = vmatmul.mubr.bf16.gmra.mxu0 %v831
        %v937 = vpop.f32.mrf.mxu0
        %v938 = vadd.f32 0.0, %v937
        %v939 = vpop.f32.mrf.mxu0
        %v940 = vpop.f32.mrf.mxu0
        %v941 = vadd.f32 0.0, %v940
        %v942 = vpop.f32.mrf.mxu0
        %943 = vdwg.mxu0
        %v963 = vunpack.c.l.b16 %v769
        %v964 = vunpack.c.l.b16 %v770
        %v965 = vunpack.c.l.b16 %v771
        %v966 = vunpack.c.l.b16 %v772
        %v967 = vunpack.c.l.b16 %v773
        %v968 = vunpack.c.l.b16 %v774
        %v969 = vunpack.c.l.b16 %v775
        %v970 = vunpack.c.l.b16 %v776
        %v971 = vunpack.c.l.b16 %v777
        %v972 = vunpack.c.l.b16 %v778
        %v973 = vunpack.c.l.b16 %v779
        %v974 = vunpack.c.l.b16 %v780
        %v975 = vunpack.c.l.b16 %v781
        %v976 = vunpack.c.l.b16 %v782
        %v977 = vunpack.c.l.b16 %v783
        %v978 = vunpack.c.l.b16 %v784
        %v979 = vunpack.c.l.b16 %v785
        %v980 = vunpack.c.l.b16 %v786
        %v981 = vpack.c.b16 %v964, %v963
        %v982 = vpack.c.b16 %v966, %v965
        %v983 = vpack.c.b16 %v968, %v967
        %v984 = vpack.c.b16 %v970, %v969
        %v985 = vpack.c.b16 %v972, %v971
        %v986 = vpack.c.b16 %v974, %v973
        %v987 = vpack.c.b16 %v976, %v975
        %v988 = vpack.c.b16 %v978, %v977
        %v989 = vpack.c.b16 %v980, %v979
        %v999 = vsel %vm899, %v817, 0
        %1001 = vmatprep.subr.bf16.mxu0 0
        %1002 = vmatpush1.bf16.msra.mxu0 %v988
        %1003 = vmatprep.subr.bf16.mxu0 0
        %1004 = vmatpush1.bf16.msra.mxu0 %v987
        %1005 = vmatprep.subr.bf16.mxu0 0
        %1006 = vmatpush1.bf16.msra.mxu0 %v986
        %1007 = vmatprep.subr.bf16.mxu0 0
        %1008 = vmatpush1.bf16.msra.mxu0 %v985
        %1009 = vmatprep.subr.bf16.mxu0 0
        %1010 = vmatpush1.bf16.msra.mxu0 %v984
        %1011 = vmatprep.subr.bf16.mxu0 0
        %1012 = vmatpush1.bf16.msra.mxu0 %v983
        %1013 = vmatprep.subr.bf16.mxu0 0
        %1014 = vmatpush1.bf16.msra.mxu0 %v982
        %1015 = vmatprep.subr.bf16.mxu0 0
        %1016 = vmatpush1.bf16.msra.mxu0 %v981
        %1017 = vmatprep.subr.bf16.mxu0 0
        %1018 = vmatpush2.bf16.msra.mxu0 0
        %1019 = vmatprep.subr.bf16.mxu0 0
        %1020 = vmatpush2.bf16.msra.mxu0 0
        %1021 = vmatprep.subr.bf16.mxu0 0
        %1022 = vmatpush2.bf16.msra.mxu0 0
        %1023 = vmatprep.subr.bf16.mxu0 0
        %1024 = vmatpush2.bf16.msra.mxu0 0
        %1025 = vmatprep.subr.bf16.mxu0 0
        %1026 = vmatpush2.bf16.msra.mxu0 0
        %1027 = vmatprep.subr.bf16.mxu0 0
        %1028 = vmatpush2.bf16.msra.mxu0 0
        %1029 = vmatprep.subr.bf16.mxu0 0
        %1030 = vmatpush2.bf16.msra.mxu0 0
        %1031 = vmatprep.subr.bf16.mxu0 0
        %1032 = vmatpush2.bf16.msra.mxu0 %v989
        %1033 = vmatprep.mubr.bf16.mxu0 %v999
        %1034 = vmatmul.mubr.bf16.gmra.mxu0 %v816
        %v1035 = vpop.f32.mrf.mxu0
        %v1036 = vadd.f32 %v938, %v1035
        %v1037 = vpop.f32.mrf.mxu0
        %v1038 = vpop.f32.mrf.mxu0
        %v1039 = vadd.f32 %v941, %v1038
        %v1040 = vpop.f32.mrf.mxu0
        %1041 = vdwg.mxu0
        %v1042 = vld [vmem:[#allocation2] sm:$0xee]
        %s1043 = scalar_lea.vmem %s3, 144
        %v1044 = vld [vmem:[%s1043] sm:$0xf]
        %v1045 = vld [vmem:[%s1043 + $0x4] sm:$0xf]
        %v1046 = vld [vmem:[%s1043 + $0x8] sm:$0xf]
        %v1047 = vld [vmem:[%s1043 + $0xc] sm:$0xf]
        %v1048 = vld [vmem:[%s1043 + $0x10] sm:$0xf]
        %v1049 = vld [vmem:[%s1043 + $0x14] sm:$0xf]
        %v1050 = vld [vmem:[%s1043 + $0x18] sm:$0xf]
        %v1051 = vld [vmem:[%s1043 + $0x1c] sm:$0xf]
        %v1052 = vld [vmem:[%s1043 + $0x20] sm:$0xf]
        %v1053 = vld [vmem:[%s1043 + $0x24] sm:$0xf]
        %v1054 = vld [vmem:[%s1043 + $0x28] sm:$0xf]
        %v1055 = vld [vmem:[%s1043 + $0x2c] sm:$0xf]
        %v1056 = vld [vmem:[%s1043 + $0x30] sm:$0xf]
        %v1057 = vld [vmem:[%s1043 + $0x34] sm:$0xf]
        %v1058 = vld [vmem:[%s1043 + $0x38] sm:$0xf]
        %v1059 = vld [vmem:[%s1043 + $0x3c] sm:$0xf]
        %v1060 = vld [vmem:[%s1043 + $0x40] sm:$0xf]
        %v1061 = vld [vmem:[%s1043 + $0x44] sm:$0xf]
        %v1063 = vunpack.c.l.b16 %v1042
        %v1064 = vunpack.c.h.b16 %v1042
        %v1065 = vpack.c.b16 %v812, %v1063
        %v1066 = vpack.c.b16 %v813, %v1064
        %v1067 = vrot.slane %v1065, 1
        %v1068 = vrot.slane %v818, 1
        %v1069 = vsel %vm568, %v1067, %v1068
        %v1070 = vrot.slane %v1066, 1
        %v1071 = vrot.slane %v819, 1
        %v1072 = vsel %vm568, %v1070, %v1071
        %v1092 = vunpack.c.l.b16 %v1044
        %v1093 = vunpack.c.l.b16 %v1045
        %v1094 = vunpack.c.l.b16 %v1046
        %v1095 = vunpack.c.l.b16 %v1047
        %v1096 = vunpack.c.l.b16 %v1048
        %v1097 = vunpack.c.l.b16 %v1049
        %v1098 = vunpack.c.l.b16 %v1050
        %v1099 = vunpack.c.l.b16 %v1051
        %v1100 = vunpack.c.l.b16 %v1052
        %v1101 = vunpack.c.l.b16 %v1053
        %v1102 = vunpack.c.l.b16 %v1054
        %v1103 = vunpack.c.l.b16 %v1055
        %v1104 = vunpack.c.l.b16 %v1056
        %v1105 = vunpack.c.l.b16 %v1057
        %v1106 = vunpack.c.l.b16 %v1058
        %v1107 = vunpack.c.l.b16 %v1059
        %v1108 = vunpack.c.l.b16 %v1060
        %v1109 = vunpack.c.l.b16 %v1061
        %v1110 = vpack.c.b16 %v1093, %v1092
        %v1111 = vpack.c.b16 %v1095, %v1094
        %v1112 = vpack.c.b16 %v1097, %v1096
        %v1113 = vpack.c.b16 %v1099, %v1098
        %v1114 = vpack.c.b16 %v1101, %v1100
        %v1115 = vpack.c.b16 %v1103, %v1102
        %v1116 = vpack.c.b16 %v1105, %v1104
        %v1117 = vpack.c.b16 %v1107, %v1106
        %v1118 = vpack.c.b16 %v1109, %v1108
        %v1129 = vsel %vm899, %v1072, 0
        %1131 = vmatprep.subr.bf16.mxu0 0
        %1132 = vmatpush1.bf16.msra.mxu0 %v1117
        %1133 = vmatprep.subr.bf16.mxu0 0
        %1134 = vmatpush1.bf16.msra.mxu0 %v1116
        %1135 = vmatprep.subr.bf16.mxu0 0
        %1136 = vmatpush1.bf16.msra.mxu0 %v1115
        %1137 = vmatprep.subr.bf16.mxu0 0
        %1138 = vmatpush1.bf16.msra.mxu0 %v1114
        %1139 = vmatprep.subr.bf16.mxu0 0
        %1140 = vmatpush1.bf16.msra.mxu0 %v1113
        %1141 = vmatprep.subr.bf16.mxu0 0
        %1142 = vmatpush1.bf16.msra.mxu0 %v1112
        %1143 = vmatprep.subr.bf16.mxu0 0
        %1144 = vmatpush1.bf16.msra.mxu0 %v1111
        %1145 = vmatprep.subr.bf16.mxu0 0
        %1146 = vmatpush1.bf16.msra.mxu0 %v1110
        %1147 = vmatprep.subr.bf16.mxu0 0
        %1148 = vmatpush2.bf16.msra.mxu0 0
        %1149 = vmatprep.subr.bf16.mxu0 0
        %1150 = vmatpush2.bf16.msra.mxu0 0
        %1151 = vmatprep.subr.bf16.mxu0 0
        %1152 = vmatpush2.bf16.msra.mxu0 0
        %1153 = vmatprep.subr.bf16.mxu0 0
        %1154 = vmatpush2.bf16.msra.mxu0 0
        %1155 = vmatprep.subr.bf16.mxu0 0
        %1156 = vmatpush2.bf16.msra.mxu0 0
        %1157 = vmatprep.subr.bf16.mxu0 0
        %1158 = vmatpush2.bf16.msra.mxu0 0
        %1159 = vmatprep.subr.bf16.mxu0 0
        %1160 = vmatpush2.bf16.msra.mxu0 0
        %1161 = vmatprep.subr.bf16.mxu0 0
        %1162 = vmatpush2.bf16.msra.mxu0 %v1118
        %1163 = vmatprep.mubr.bf16.mxu0 %v1129
        %1164 = vmatmul.mubr.bf16.gmra.mxu0 %v1069
        %v1165 = vpop.f32.mrf.mxu0
        %v1166 = vadd.f32 0.0, %v1165
        %v1167 = vpop.f32.mrf.mxu0
        %v1168 = vpop.f32.mrf.mxu0
        %v1169 = vadd.f32 0.0, %v1168
        %v1170 = vpop.f32.mrf.mxu0
        %1171 = vdwg.mxu0
        %v1172 = vadd.f32 %v1036, %v1166
        %v1173 = vadd.f32 %v1039, %v1169
        %v1174 = vld [vmem:[%s4] sm:$0x1]
        %v1176 = vlaneseq
        %v1177 = vshrl.u32 %v1176, 7
        %v1178 = vsub.s32 0, %v1177
        %v1179 = vrot.slane %v1174, %v1178
        %v1181 = vadd.f32 %v1172, %v1179
        %v1182 = vadd.f32 %v1173, %v1179
        %v1183 = vld [vmem:[%s222] sm:$0xf]
        %v1184 = vld [vmem:[%s222 + $0x4] sm:$0xf]
        %v1185 = vld [vmem:[%s222 + $0x8] sm:$0x1]
        %v1186 = vunpack.c.l.bf16 %v1183
        %v1187 = vunpack.c.l.bf16 %v1184
        %v1188 = vunpack.c.l.bf16 %v1185
        %vm1192 = vcmask 1046528
        %v1193 = vrot.slane %v1186, 1
        %v1194 = vrot.slane %v1187, 1
        %v1195 = vsel %vm1192, %v1193, %v1194
        %v1196 = vrot.slane %v1188, 1
        %v1197 = vsel %vm1192, %v1194, %v1196
        %v1200 = vadd.f32 %v1181, %v1195
        %v1201 = vadd.f32 %v1182, %v1197
        %v1202 = vmax.f32 %v1200, 0.0
        %v1203 = vmax.f32 %v1201, 0.0
        %v1204 = vpack.c.bf16 %v1203, %v1202
        %v1206 = vunpack.c.l.b16 %v1204
        %v1207 = vunpack.c.h.b16 %v1204
        %v1208 = vpack.c.b16 %v1206, %v1206
        %v1209 = vpack.c.b16 %v1207, %v1207
        %1212 = vst [vmem:[%s217] sm:$0xf] %v1208
        %1213 = vst [vmem:[%s217 + $0x4] sm:$0xf] %v1209
        %s1214 = sand.u32 %s137, 1
        %s1215 = scalar_lea.sflag [#allocation4], %s1214
        %s1216 = sand.u32 %s137, 1
        %s1217 = smul.addr %s1216, 8
        %s1218 = scalar_lea.vmem [#allocation3], %s1217
        // Predicated region
        $region41: #{tpu_custom_call.1} parent=39 // pred_check
          %p1219 = pneg %p147
        $region42: #{tpu_custom_call.1} parent=39 // pred_check_branch
          %1221 = sbr.rel (%p1219) target = $region44
        $region43: #{tpu_custom_call.1} parent=39 // pred_region
          %s1223 = ssub.s32 128, 128
          %1224 = vsyncadd %s1215, %s1223
          %s1225 = smul.addr %s19, 2
          %s1226 = smul.addr %s1225, 64
          %s1227 = scalar_lea.hbm %s5, %s1226
          %s1228 = sshll.u32 %s1218, 4
          %s1229 = int_to_ptr.vmem [resolvable:$true] %s1228
          %1234 = dma.vmem_to_hbm [thread:$0]  %s1229, 128, %s1227, %s1215, 64, 64, 4
        $region44: #{tpu_custom_call.1} parent=39 // pred_fallthru
          _
      $region40: #{tpu_custom_call.1} parent=5 // pred_fallthru
        _
      %p1235 = scmp.le.s32.totalorder 2, %s14
      // Predicated region
      $region45: #{tpu_custom_call.1} parent=5 // pred_check
        %p1236 = pneg %p1235
      $region46: #{tpu_custom_call.1} parent=5 // pred_check_branch
        %1238 = sbr.rel (%p1236) target = $region48
      $region47: #{tpu_custom_call.1} parent=5 // pred_region
        %s1239 = ssub.s32 %s14, 2
        // Predicated region
        $region49: #{tpu_custom_call.1} parent=47 // pred_check
          %p1240 = pneg %p153
        $region50: #{tpu_custom_call.1} parent=47 // pred_check_branch
          %1242 = sbr.rel (%p1240) target = $region52
        $region51: #{tpu_custom_call.1} parent=47 // pred_region
          %s1243 = sand.u32 %s138, 1
          %s1244 = scalar_lea.sflag [#allocation4], %s1243
          %s1245 = sand.u32 %s138, 1
          %s1246 = smul.addr %s1245, 8
          %s1247 = scalar_lea.vmem [#allocation3], %s1246
          %1248 = dma.done %s1244, 128
        $region52: #{tpu_custom_call.1} parent=47 // pred_fallthru
          _
      $region48: #{tpu_custom_call.1} parent=5 // pred_fallthru
        _
    $region6: #{tpu_custom_call.1} parent=1 // loop_footer
      %s18 = sadd.s32 1, %s14
    $region7: #{tpu_custom_call.1} parent=1 // loop_footer_branch
      %13 = sbr.rel target = $region3
    $region8: #{tpu_custom_call.1} parent=1 // loop_exit
      _
    %1249 = vsyncpa [#allocation4], 1
    %s1250 = scalar_lea.sflag [#allocation4], 1
    %1251 = vsyncpa %s1250, 1

</llo_original>
